<compile_context>
chip_gen: v7x
topology: tpu7x:2x2x1
jax: 0.10.0
libtpu: 0.0.40
codegen_flags: <defaults>
</compile_context>

<pallas_src>
import functools

import numpy as np

import jax
import jax.numpy as jnp
from jax import lax
from jax.experimental import pallas as pl
from jax.experimental.pallas import tpu as pltpu


# tap order matches the (ky, kx) order of the conv weight: ky = dy + 1, kx = dx + 1
_TAPS = tuple((dy, dx) for dy in (-1, 0, 1) for dx in (-1, 0, 1))
_EPS = 1e-5


@functools.lru_cache(maxsize=None)
def _conv_masks_np(H, W):
    """(9, H*W) f32 validity masks of the zero-padded 3x3 conv taps."""
    yy, xx = np.meshgrid(np.arange(H), np.arange(W), indexing="ij")
    yy = yy.reshape(-1)
    xx = xx.reshape(-1)
    m = np.zeros((9, H * W), np.float32)
    for i, (dy, dx) in enumerate(_TAPS):
        valid = (yy + dy >= 0) & (yy + dy < H) & (xx + dx >= 0) & (xx + dx < W)
        m[i] = valid.astype(np.float32)
    return m


# pltpu.roll follows the jnp.roll convention (result[i] = x[(i - shift) % n]); this is
# the static default.  The eager probe below runs once at import time (never inside a
# jit trace) purely as a per-backend sanity check and silently falls back if it cannot
# run.  sign == -1  <=>  shift = -offset gives result[p] = x[p + offset].
_ROLL_SIGN = -1


def _probe_roll_sign():
    def probe(x_ref, o_ref):
        o_ref[...] = pltpu.roll(x_ref[...], shift=1, axis=1)

    x = jnp.arange(8 * 128, dtype=jnp.float32).reshape(8, 128)
    y = pl.pallas_call(probe, out_shape=jax.ShapeDtypeStruct((8, 128), jnp.float32))(x)
    y00 = float(jax.device_get(y)[0, 0])
    if y00 == 127.0:      # jnp.roll convention
        return -1
    if y00 == 1.0:        # opposite convention
        return 1
    return -1


try:  # pragma: no cover - safety net only; the documented convention is the default
    _ROLL_SIGN = _probe_roll_sign()
except Exception:
    _ROLL_SIGN = -1


def _tap_shifts(H, W):
    """Static lane-roll amounts so that rolled[p] == act[p + dy*W + dx] (where valid)."""
    HW = H * W
    return tuple((_ROLL_SIGN * (dy * W + dx)) % HW for dy, dx in _TAPS)


# ------------------------------ in-kernel ODEfunc math ------------------------------

def _odefunc_eval(h, t, mask_big, gammas, betas, w1, ts1, b1, w2, ts2, b2,
                  *, Gp, shifts):
    """One evaluation of the dynamics f(t, h) on a packed (Cp, HW) activation."""
    Cp, HW = h.shape
    cg = Cp // Gp
    inv_n = 1.0 / (HW * cg)

    def group_norm(x, i, relu):
        # per-channel lane reductions; groups combined only when channels/group > 1
        s1 = jnp.sum(x, axis=1, keepdims=True)                                # (Cp, 1)
        if cg > 1:
            s1 = jnp.broadcast_to(
                jnp.sum(s1.reshape(Gp, cg), axis=1, keepdims=True), (Gp, cg)
            ).reshape(Cp, 1)
        mu = s1 * inv_n
        d = x - mu
        s2 = jnp.sum(d * d, axis=1, keepdims=True)
        if cg > 1:
            s2 = jnp.broadcast_to(
                jnp.sum(s2.reshape(Gp, cg), axis=1, keepdims=True), (Gp, cg)
            ).reshape(Cp, 1)
        a = lax.rsqrt(s2 * inv_n + _EPS) * gammas[i]
        y = d * a + betas[i]
        return jnp.maximum(y, 0.0) if relu else y

    def conv3x3(x, w_i2c, tsum, bias):
        # im2col: concatenate the 9 rolled neighborhoods on the sublane axis, mask the
        # out-of-image lanes, and contract channels+taps with a single MXU matmul.
        pieces = [x if s == 0 else pltpu.roll(x, shift=s, axis=1) for s in shifts]
        g = jnp.concatenate(pieces, axis=0) * mask_big                        # (9Cp, HW)
        out = jnp.dot(w_i2c, g, preferred_element_type=jnp.float32)           # (Cp, HW)
        # constant-t input channel (precomputed mask-weighted sum, hoisted out of the
        # tap loop) plus bias -- scaled by the scalar t in-kernel.
        return out + t * tsum + bias

    h = group_norm(h, 0, relu=True)
    h = conv3x3(h, w1, ts1, b1)
    h = group_norm(h, 1, relu=True)
    h = conv3x3(h, w2, ts2, b2)
    h = group_norm(h, 2, relu=False)
    return h


# ------------------------------ kernels ------------------------------

def _rk4_kernel(x_ref, mask_ref, gamma_ref, beta_ref,
                w1_ref, ts1_ref, b1_ref, w2_ref, ts2_ref, b2_ref, o_ref,
                *, Gp, shifts, num_steps):
    # load all constants once; they stay live across the whole integration
    consts = (mask_ref[...], gamma_ref[...], beta_ref[...],
              w1_ref[...], ts1_ref[...], b1_ref[...],
              w2_ref[...], ts2_ref[...], b2_ref[...])
    dt = 1.0 / num_steps

    def f(t, y):
        return _odefunc_eval(y, t, *consts, Gp=Gp, shifts=shifts)

    def step(i, y):
        t = i.astype(jnp.float32) * dt
        k1 = f(t, y)
        k2 = f(t + 0.5 * dt, y + (0.5 * dt) * k1)
        k3 = f(t + 0.5 * dt, y + (0.5 * dt) * k2)
        k4 = f(t + dt, y + dt * k3)
        return y + (dt / 6.0) * (k1 + 2.0 * k2 + 2.0 * k3 + k4)

    y = lax.fori_loop(0, num_steps, step, x_ref[0].astype(jnp.float32))
    o_ref[0] = y.astype(o_ref.dtype)


def _eval_kernel(t_ref, x_ref, mask_ref, gamma_ref, beta_ref,
                 w1_ref, ts1_ref, b1_ref, w2_ref, ts2_ref, b2_ref, o_ref,
                 *, Gp, shifts):
    t = t_ref[0]                                                  # SMEM scalar
    y = _odefunc_eval(x_ref[0].astype(jnp.float32), t,
                      mask_ref[...], gamma_ref[...], beta_ref[...],
                      w1_ref[...], ts1_ref[...], b1_ref[...],
                      w2_ref[...], ts2_ref[...], b2_ref[...],
                      Gp=Gp, shifts=shifts)
    o_ref[0] = y.astype(o_ref.dtype)


# ------------------------------ host-side operand prep ------------------------------

def _pack_factor(N, C):
    # pack 2 images per sublane block when that fills the 8-sublane vreg height
    if N % 2 == 0 and C % 8 != 0 and (2 * C) % 8 == 0:
        return 2
    return 1


def _prep_operands(params, C, H, W, P):
    """Packed, kernel-ready operands (all constant across the whole integration)."""
    HW = H * W
    Cp = P * C
    masks = jnp.asarray(_conv_masks_np(H, W))                     # (9, HW) constant

    gammas = jnp.stack([params["gn1_w"], params["gn2_w"], params["gn3_w"]])  # (3, C)
    betas = jnp.stack([params["gn1_b"], params["gn2_b"], params["gn3_b"]])
    gammas = jnp.tile(gammas, (1, P)).reshape(3, Cp, 1).astype(jnp.float32)
    betas = jnp.tile(betas, (1, P)).reshape(3, Cp, 1).astype(jnp.float32)

    def prep_conv(w_hwio, bias):
        # HWIO (3, 3, C+1, C); input channel 0 is the broadcast-t channel.
        wa = jnp.transpose(w_hwio[:, :, 1:, :], (0, 1, 3, 2)).reshape(9, C, C)  # (tap, o, i)
        wt = w_hwio[:, :, 0, :].reshape(9, C)                                    # (tap, o)
        # block-diagonal over the P packed images (pure concatenation -> weights exact)
        rows = []
        for p in range(P):
            rows.append(jnp.concatenate(
                [wa if q == p else jnp.zeros_like(wa) for q in range(P)], axis=2))
        wa_p = jnp.concatenate(rows, axis=1)                       # (9, Cp, Cp)
        # im2col layout: w_i2c[o, tap*Cp + i] = wa_p[tap, o, i]
        w_i2c = jnp.transpose(wa_p, (1, 0, 2)).reshape(Cp, 9 * Cp)
        # activation-independent t-channel term: sum_tap wt[tap] (x) mask[tap]
        tsum = jnp.sum(wt[:, :, None] * masks[:, None, :], axis=0)  # (C, HW), exact f32
        tsum = jnp.tile(tsum, (P, 1))                               # (Cp, HW)
        b = jnp.tile(bias.reshape(C), (P,)).reshape(Cp, 1)
        return (w_i2c.astype(jnp.float32), tsum.astype(jnp.float32),
                b.astype(jnp.float32))

    w1, ts1, b1 = prep_conv(params["conv1_w"], params["conv1_b"])
    w2, ts2, b2 = prep_conv(params["conv2_w"], params["conv2_b"])
    mask_big = jnp.repeat(masks, Cp, axis=0)                       # (9*Cp, HW)
    return mask_big, gammas, betas, w1, ts1, b1, w2, ts2, b2


def _build_specs(Cp, HW):
    const2 = lambda n, *_: (0, 0)
    const3 = lambda n, *_: (0, 0, 0)
    in_specs = [
        pl.BlockSpec((1, Cp, HW), lambda n, *_: (n, 0, 0)),        # packed activations
        pl.BlockSpec((9 * Cp, HW), const2),                        # tap validity masks
        pl.BlockSpec((3, Cp, 1), const3),                          # GN gammas
        pl.BlockSpec((3, Cp, 1), const3),                          # GN betas
        pl.BlockSpec((Cp, 9 * Cp), const2),                        # conv1 im2col weights
        pl.BlockSpec((Cp, HW), const2),                            # conv1 t-channel sum
        pl.BlockSpec((Cp, 1), const2),                             # conv1 bias
        pl.BlockSpec((Cp, 9 * Cp), const2),                        # conv2 im2col weights
        pl.BlockSpec((Cp, HW), const2),                            # conv2 t-channel sum
        pl.BlockSpec((Cp, 1), const2),                             # conv2 bias
    ]
    out_spec = pl.BlockSpec((1, Cp, HW), lambda n, *_: (n, 0, 0))
    return in_specs, out_spec


# ------------------------------ public entry points ------------------------------

def odefunc_forward(params, t, x_nchw):
    """Single ODEfunc.forward(t, x) evaluation (NCHW in / NCHW out), one fused kernel."""
    N, C, H, W = x_nchw.shape
    HW = H * W
    G = min(32, C)
    P = _pack_factor(N, C)
    NP, Cp, Gp = N // P, P * C, P * G
    x = x_nchw.reshape(NP, Cp, HW)                    # pair-packed, channel-major layout

    operands = _prep_operands(params, C, H, W, P)
    shifts = _tap_shifts(H, W)
    in_specs, out_spec = _build_specs(Cp, HW)
    kernel = functools.partial(_eval_kernel, Gp=Gp, shifts=shifts)
    t_arr = jnp.asarray(t, jnp.float32).reshape(1)

    out = pl.pallas_call(
        kernel,
        out_shape=jax.ShapeDtypeStruct((NP, Cp, HW), x_nchw.dtype),
        grid_spec=pltpu.PrefetchScalarGridSpec(
            num_scalar_prefetch=1,                    # t -> SMEM, scaled in-kernel
            grid=(NP,),
            in_specs=in_specs,
            out_specs=out_spec,
        ),
        compiler_params=pltpu.CompilerParams(dimension_semantics=("parallel",)),
    )(t_arr, x, *operands)
    return out.reshape(N, C, H, W)


def odeblock_forward(params, x_nchw, *, num_steps=8):
    """ODEBlock.forward: integrate dy/dt = odefunc(t, y), t: 0 -> 1, return y(1).

    The entire fixed-step RK4 integration (num_steps x 4 stage evaluations) is fused
    into a single pallas_call; the state never leaves VMEM between stages/steps.
    """
    # TODO(synk): torchdiffeq's adaptive-step dopri5 (rtol=atol=1e-3) error control is
    # host-side data-dependent control flow with no clean Pallas equivalent; a
    # fixed-step classic RK4 integrator over the same [0, 1] interval is used instead.
    N, C, H, W = x_nchw.shape
    HW = H * W
    G = min(32, C)
    P = _pack_factor(N, C)
    NP, Cp, Gp = N // P, P * C, P * G
    x = x_nchw.reshape(NP, Cp, HW)

    operands = _prep_operands(params, C, H, W, P)
    shifts = _tap_shifts(H, W)
    in_specs, out_spec = _build_specs(Cp, HW)
    kernel = functools.partial(_rk4_kernel, Gp=Gp, shifts=shifts, num_steps=num_steps)

    out = pl.pallas_call(
        kernel,
        out_shape=jax.ShapeDtypeStruct((NP, Cp, HW), x_nchw.dtype),
        grid_spec=pltpu.PrefetchScalarGridSpec(
            num_scalar_prefetch=0,
            grid=(NP,),
            in_specs=in_specs,
            out_specs=out_spec,
        ),
        compiler_params=pltpu.CompilerParams(dimension_semantics=("parallel",)),
    )(x, *operands)
    return out.reshape(N, C, H, W)


# ------------------------------ pure-JAX reference ------------------------------

def _ref_group_norm(x_nhwc, gamma, beta, G, eps=_EPS):
    N, H, W, C = x_nhwc.shape
    xg = x_nhwc.reshape(N, H, W, G, C // G)
    mean = jnp.mean(xg, axis=(1, 2, 4), keepdims=True)
    var = jnp.mean((xg - mean) ** 2, axis=(1, 2, 4), keepdims=True)
    y = ((xg - mean) / jnp.sqrt(var + eps)).reshape(N, H, W, C)
    return y * gamma.reshape(1, 1, 1, C) + beta.reshape(1, 1, 1, C)


def _ref_concat_conv(t, x_nhwc, w_hwio, bias):
    N, H, W, C = x_nhwc.shape
    tt = jnp.ones((N, H, W, 1), x_nhwc.dtype) * t
    xc = jnp.concatenate([tt, x_nhwc], axis=-1)
    y = lax.conv_general_dilated(xc, w_hwio, (1, 1), "SAME",
                                 dimension_numbers=("NHWC", "HWIO", "NHWC"),
                                 precision=lax.Precision.HIGHEST)
    return y + bias.reshape(1, 1, 1, -1)


def odefunc_ref(params, t, x_nchw):
    x = jnp.transpose(x_nchw, (0, 2, 3, 1))
    dim = x.shape[-1]
    G = min(32, dim)
    out = jnp.maximum(_ref_group_norm(x, params["gn1_w"], params["gn1_b"], G), 0.0)
    out = _ref_concat_conv(t, out, params["conv1_w"], params["conv1_b"])
    out = jnp.maximum(_ref_group_norm(out, params["gn2_w"], params["gn2_b"], G), 0.0)
    out = _ref_concat_conv(t, out, params["conv2_w"], params["conv2_b"])
    out = _ref_group_norm(out, params["gn3_w"], params["gn3_b"], G)
    return jnp.transpose(out, (0, 3, 1, 2))


def odeblock_ref(params, x_nchw, *, num_steps=8):
    dt = 1.0 / num_steps

    def step(y, i):
        t = i * dt
        k1 = odefunc_ref(params, t, y)
        k2 = odefunc_ref(params, t + 0.5 * dt, y + (0.5 * dt) * k1)
        k3 = odefunc_ref(params, t + 0.5 * dt, y + (0.5 * dt) * k2)
        k4 = odefunc_ref(params, t + dt, y + dt * k3)
        return y + (dt / 6.0) * (k1 + 2.0 * k2 + 2.0 * k3 + k4), None

    y, _ = lax.scan(step, x_nchw, jnp.arange(num_steps, dtype=jnp.float32))
    return y


# ----------------------------------- main -----------------------------------

if __name__ == "__main__":
    key = jax.random.PRNGKey(0)
    N, C, H, W = 2, 4, 16, 16                                     # dim = 4
    ks = jax.random.split(key, 11)
    x = jax.random.normal(ks[0], (N, C, H, W), jnp.float32)
    t = jnp.float32(0.5)

    # Deterministic synthetic parameters (shapes match ODEfunc(dim=4)).
    # Conv weights are HWIO: (3, 3, dim+1, dim); input channel 0 is the t channel.
    params = {
        "gn1_w": 1.0 + 0.1 * jax.random.normal(ks[1], (C,), jnp.float32),
        "gn1_b": 0.1 * jax.random.normal(ks[2], (C,), jnp.float32),
        "conv1_w": 0.1 * jax.random.normal(ks[3], (3, 3, C + 1, C), jnp.float32),
        "conv1_b": 0.1 * jax.random.normal(ks[4], (C,), jnp.float32),
        "gn2_w": 1.0 + 0.1 * jax.random.normal(ks[5], (C,), jnp.float32),
        "gn2_b": 0.1 * jax.random.normal(ks[6], (C,), jnp.float32),
        "conv2_w": 0.1 * jax.random.normal(ks[7], (3, 3, C + 1, C), jnp.float32),
        "conv2_b": 0.1 * jax.random.normal(ks[8], (C,), jnp.float32),
        "gn3_w": 1.0 + 0.1 * jax.random.normal(ks[9], (C,), jnp.float32),
        "gn3_b": 0.1 * jax.random.normal(ks[10], (C,), jnp.float32),
    }

    # single ODEfunc evaluation: fused Pallas kernel vs pure-JAX reference
    out = jax.block_until_ready(jax.jit(odefunc_forward)(params, t, x))
    ref = jax.block_until_ready(jax.jit(odefunc_ref)(params, t, x))
    assert out.shape == (N, C, H, W), out.shape
    assert out.dtype == jnp.float32, out.dtype
    err = float(jnp.max(jnp.abs(out - ref)))
    assert np.allclose(np.asarray(out), np.asarray(ref), atol=1e-3, rtol=1e-3), err

    # ODEBlock forward: full fixed-step RK4 integration fused into one pallas_call
    yk = jax.block_until_ready(jax.jit(odeblock_forward)(params, x))
    yr = jax.block_until_ready(jax.jit(odeblock_ref)(params, x))
    assert yk.shape == (N, C, H, W), yk.shape
    err2 = float(jnp.max(jnp.abs(yk - yr)))
    assert np.allclose(np.asarray(yk), np.asarray(yr), atol=2e-3, rtol=2e-3), err2

    print("KERNEL_OK")
</pallas_src>

<mosaic_0001>
module attributes {stable_mosaic.version = 11 : i64} {
  func.func @probe(%arg0: memref<8x128xf32, #tpu.memory_space<vmem>>, %arg1: memref<8x128xf32, #tpu.memory_space<vmem>>) attributes {dimension_semantics = [], scalar_prefetch = 0 : i64, scratch_operands = 0 : i64, tpu.core_type = #tpu.core_type<tc>} {
    %c0 = arith.constant 0 : index
    %c0_0 = arith.constant 0 : index
    %0 = vector.load %arg0[%c0, %c0_0] : memref<8x128xf32, #tpu.memory_space<vmem>>, vector<8x128xf32>
    %c1_i32 = arith.constant 1 : i32
    %1 = tpu.dynamic_rotate %0 by %c1_i32 dim 1 : vector<8x128xf32>, i32 -> vector<8x128xf32>
    %c0_1 = arith.constant 0 : index
    %c0_2 = arith.constant 0 : index
    %2 = vector.load %arg1[%c0_1, %c0_2] : memref<8x128xf32, #tpu.memory_space<vmem>>, vector<8x128xf32>
    tpu.vector_store %arg1[%c0_1, %c0_2], %1 {strides = array<i32>} : memref<8x128xf32, #tpu.memory_space<vmem>>, vector<8x128xf32>,
    return
  }
}

module attributes {stable_mosaic.version = 11 : i64} {
  func.func @_eval_kernel(%arg0: i32, %arg1: memref<1xf32, #tpu.memory_space<smem>>, %arg2: memref<1x8x256xf32, #tpu.memory_space<vmem>>, %arg3: memref<72x256xf32, #tpu.memory_space<vmem>>, %arg4: memref<3x8x1xf32, #tpu.memory_space<vmem>>, %arg5: memref<3x8x1xf32, #tpu.memory_space<vmem>>, %arg6: memref<8x72xf32, #tpu.memory_space<vmem>>, %arg7: memref<8x256xf32, #tpu.memory_space<vmem>>, %arg8: memref<8x1xf32, #tpu.memory_space<vmem>>, %arg9: memref<8x72xf32, #tpu.memory_space<vmem>>, %arg10: memref<8x256xf32, #tpu.memory_space<vmem>>, %arg11: memref<8x1xf32, #tpu.memory_space<vmem>>, %arg12: memref<1x8x256xf32, #tpu.memory_space<vmem>>) attributes {dimension_semantics = [#tpu.dimension_semantics<parallel>], iteration_bounds = array<i64: 1>, scalar_prefetch = 1 : i64, scratch_operands = 0 : i64, tpu.core_type = #tpu.core_type<tc>, window_params = [{transform_indices = @transform_0, window_bounds = array<i64: 1, 8, 256>}, {pipeline_mode = #tpu.pipeline_mode<synchronous>, transform_indices = @transform_1, window_bounds = array<i64: 72, 256>}, {pipeline_mode = #tpu.pipeline_mode<synchronous>, transform_indices = @transform_2, window_bounds = array<i64: 3, 8, 1>}, {pipeline_mode = #tpu.pipeline_mode<synchronous>, transform_indices = @transform_3, window_bounds = array<i64: 3, 8, 1>}, {pipeline_mode = #tpu.pipeline_mode<synchronous>, transform_indices = @transform_4, window_bounds = array<i64: 8, 72>}, {pipeline_mode = #tpu.pipeline_mode<synchronous>, transform_indices = @transform_5, window_bounds = array<i64: 8, 256>}, {pipeline_mode = #tpu.pipeline_mode<synchronous>, transform_indices = @transform_6, window_bounds = array<i64: 8, 1>}, {pipeline_mode = #tpu.pipeline_mode<synchronous>, transform_indices = @transform_7, window_bounds = array<i64: 8, 72>}, {pipeline_mode = #tpu.pipeline_mode<synchronous>, transform_indices = @transform_8, window_bounds = array<i64: 8, 256>}, {pipeline_mode = #tpu.pipeline_mode<synchronous>, transform_indices = @transform_9, window_bounds = array<i64: 8, 1>}, {transform_indices = @transform_10, window_bounds = array<i64: 1, 8, 256>}]} {
    %c0 = arith.constant 0 : index
    %0 = memref.load %arg1[%c0] : memref<1xf32, #tpu.memory_space<smem>>
    %c0_0 = arith.constant 0 : index
    %c0_1 = arith.constant 0 : index
    %c0_2 = arith.constant 0 : index
    %1 = vector.load %arg2[%c0_0, %c0_1, %c0_2] : memref<1x8x256xf32, #tpu.memory_space<vmem>>, vector<1x8x256xf32>
    %2 = vector.shape_cast %1 : vector<1x8x256xf32> to vector<8x256xf32>
    %c0_3 = arith.constant 0 : index
    %c0_4 = arith.constant 0 : index
    %3 = vector.load %arg3[%c0_3, %c0_4] : memref<72x256xf32, #tpu.memory_space<vmem>>, vector<72x256xf32>
    %c0_5 = arith.constant 0 : index
    %c0_6 = arith.constant 0 : index
    %c0_7 = arith.constant 0 : index
    %4 = vector.load %arg4[%c0_5, %c0_6, %c0_7] : memref<3x8x1xf32, #tpu.memory_space<vmem>>, vector<3x8x1xf32>
    %c0_8 = arith.constant 0 : index
    %c0_9 = arith.constant 0 : index
    %c0_10 = arith.constant 0 : index
    %5 = vector.load %arg5[%c0_8, %c0_9, %c0_10] : memref<3x8x1xf32, #tpu.memory_space<vmem>>, vector<3x8x1xf32>
    %c0_11 = arith.constant 0 : index
    %c0_12 = arith.constant 0 : index
    %6 = vector.load %arg6[%c0_11, %c0_12] : memref<8x72xf32, #tpu.memory_space<vmem>>, vector<8x72xf32>
    %c0_13 = arith.constant 0 : index
    %c0_14 = arith.constant 0 : index
    %7 = vector.load %arg7[%c0_13, %c0_14] : memref<8x256xf32, #tpu.memory_space<vmem>>, vector<8x256xf32>
    %c0_15 = arith.constant 0 : index
    %c0_16 = arith.constant 0 : index
    %8 = vector.load %arg8[%c0_15, %c0_16] : memref<8x1xf32, #tpu.memory_space<vmem>>, vector<8x1xf32>
    %c0_17 = arith.constant 0 : index
    %c0_18 = arith.constant 0 : index
    %9 = vector.load %arg9[%c0_17, %c0_18] : memref<8x72xf32, #tpu.memory_space<vmem>>, vector<8x72xf32>
    %c0_19 = arith.constant 0 : index
    %c0_20 = arith.constant 0 : index
    %10 = vector.load %arg10[%c0_19, %c0_20] : memref<8x256xf32, #tpu.memory_space<vmem>>, vector<8x256xf32>
    %c0_21 = arith.constant 0 : index
    %c0_22 = arith.constant 0 : index
    %11 = vector.load %arg11[%c0_21, %c0_22] : memref<8x1xf32, #tpu.memory_space<vmem>>, vector<8x1xf32>
    %cst = arith.constant dense<0.000000e+00> : vector<8xf32>
    %12 = vector.multi_reduction <add>, %2, %cst [1] : vector<8x256xf32> to vector<8xf32>
    %13 = vector.shape_cast %12 : vector<8xf32> to vector<8x1xf32>
    %cst_23 = arith.constant 3.906250e-03 : f32
    %14 = vector.broadcast %cst_23 : f32 to vector<8x1xf32>
    %15 = arith.mulf %13, %14 : vector<8x1xf32>
    %16 = vector.broadcast %15 : vector<8x1xf32> to vector<8x256xf32>
    %17 = arith.subf %2, %16 : vector<8x256xf32>
    %18 = arith.mulf %17, %17 : vector<8x256xf32>
    %cst_24 = arith.constant dense<0.000000e+00> : vector<8xf32>
    %19 = vector.multi_reduction <add>, %18, %cst_24 [1] : vector<8x256xf32> to vector<8xf32>
    %20 = vector.shape_cast %19 : vector<8xf32> to vector<8x1xf32>
    %cst_25 = arith.constant 3.906250e-03 : f32
    %21 = vector.broadcast %cst_25 : f32 to vector<8x1xf32>
    %22 = arith.mulf %20, %21 : vector<8x1xf32>
    %cst_26 = arith.constant 9.99999974E-6 : f32
    %23 = vector.broadcast %cst_26 : f32 to vector<8x1xf32>
    %24 = arith.addf %22, %23 : vector<8x1xf32>
    %25 = math.rsqrt %24 : vector<8x1xf32>
    %26 = vector.extract_strided_slice %4 {offsets = [0, 0, 0], sizes = [1, 8, 1], strides = [1, 1, 1]} : vector<3x8x1xf32> to vector<1x8x1xf32>
    %27 = vector.shape_cast %26 : vector<1x8x1xf32> to vector<8x1xf32>
    %28 = arith.mulf %25, %27 : vector<8x1xf32>
    %29 = vector.broadcast %28 : vector<8x1xf32> to vector<8x256xf32>
    %30 = arith.mulf %17, %29 : vector<8x256xf32>
    %31 = vector.extract_strided_slice %5 {offsets = [0, 0, 0], sizes = [1, 8, 1], strides = [1, 1, 1]} : vector<3x8x1xf32> to vector<1x8x1xf32>
    %32 = vector.shape_cast %31 : vector<1x8x1xf32> to vector<8x1xf32>
    %33 = vector.broadcast %32 : vector<8x1xf32> to vector<8x256xf32>
    %34 = arith.addf %30, %33 : vector<8x256xf32>
    %cst_27 = arith.constant 0.000000e+00 : f32
    %35 = vector.broadcast %cst_27 : f32 to vector<8x256xf32>
    %36 = arith.maximumf %34, %35 : vector<8x256xf32>
    %c17_i32 = arith.constant 17 : i32
    %37 = tpu.dynamic_rotate %36 by %c17_i32 dim 1 : vector<8x256xf32>, i32 -> vector<8x256xf32>
    %c16_i32 = arith.constant 16 : i32
    %38 = tpu.dynamic_rotate %36 by %c16_i32 dim 1 : vector<8x256xf32>, i32 -> vector<8x256xf32>
    %c15_i32 = arith.constant 15 : i32
    %39 = tpu.dynamic_rotate %36 by %c15_i32 dim 1 : vector<8x256xf32>, i32 -> vector<8x256xf32>
    %c1_i32 = arith.constant 1 : i32
    %40 = tpu.dynamic_rotate %36 by %c1_i32 dim 1 : vector<8x256xf32>, i32 -> vector<8x256xf32>
    %c255_i32 = arith.constant 255 : i32
    %41 = tpu.dynamic_rotate %36 by %c255_i32 dim 1 : vector<8x256xf32>, i32 -> vector<8x256xf32>
    %c241_i32 = arith.constant 241 : i32
    %42 = tpu.dynamic_rotate %36 by %c241_i32 dim 1 : vector<8x256xf32>, i32 -> vector<8x256xf32>
    %c240_i32 = arith.constant 240 : i32
    %43 = tpu.dynamic_rotate %36 by %c240_i32 dim 1 : vector<8x256xf32>, i32 -> vector<8x256xf32>
    %c239_i32 = arith.constant 239 : i32
    %44 = tpu.dynamic_rotate %36 by %c239_i32 dim 1 : vector<8x256xf32>, i32 -> vector<8x256xf32>
    %45 = tpu.concatenate %37, %38, %39, %40, %36, %41, %42, %43, %44 in 0 : vector<8x256xf32>, vector<8x256xf32>, vector<8x256xf32>, vector<8x256xf32>, vector<8x256xf32>, vector<8x256xf32>, vector<8x256xf32>, vector<8x256xf32>, vector<8x256xf32> -> vector<72x256xf32>
    %46 = arith.mulf %45, %3 : vector<72x256xf32>
    %cst_28 = arith.constant dense<0.000000e+00> : vector<8x256xf32>
    %47 = tpu.matmul %6, %46, %cst_28 {dimension_numbers = #tpu.dot_dimension_numbers<[1], [0], [0], [1], [0, 0, 1, 1], [], []>} : vector<8x72xf32>, vector<72x256xf32>, vector<8x256xf32> -> vector<8x256xf32>
    %48 = vector.broadcast %0 : f32 to vector<8x256xf32>
    %49 = arith.mulf %48, %7 : vector<8x256xf32>
    %50 = arith.addf %47, %49 : vector<8x256xf32>
    %51 = vector.broadcast %8 : vector<8x1xf32> to vector<8x256xf32>
    %52 = arith.addf %50, %51 : vector<8x256xf32>
    %cst_29 = arith.constant dense<0.000000e+00> : vector<8xf32>
    %53 = vector.multi_reduction <add>, %52, %cst_29 [1] : vector<8x256xf32> to vector<8xf32>
    %54 = vector.shape_cast %53 : vector<8xf32> to vector<8x1xf32>
    %cst_30 = arith.constant 3.906250e-03 : f32
    %55 = vector.broadcast %cst_30 : f32 to vector<8x1xf32>
    %56 = arith.mulf %54, %55 : vector<8x1xf32>
    %57 = vector.broadcast %56 : vector<8x1xf32> to vector<8x256xf32>
    %58 = arith.subf %52, %57 : vector<8x256xf32>
    %59 = arith.mulf %58, %58 : vector<8x256xf32>
    %cst_31 = arith.constant dense<0.000000e+00> : vector<8xf32>
    %60 = vector.multi_reduction <add>, %59, %cst_31 [1] : vector<8x256xf32> to vector<8xf32>
    %61 = vector.shape_cast %60 : vector<8xf32> to vector<8x1xf32>
    %cst_32 = arith.constant 3.906250e-03 : f32
    %62 = vector.broadcast %cst_32 : f32 to vector<8x1xf32>
    %63 = arith.mulf %61, %62 : vector<8x1xf32>
    %cst_33 = arith.constant 9.99999974E-6 : f32
    %64 = vector.broadcast %cst_33 : f32 to vector<8x1xf32>
    %65 = arith.addf %63, %64 : vector<8x1xf32>
    %66 = math.rsqrt %65 : vector<8x1xf32>
    %67 = vector.extract_strided_slice %4 {offsets = [1, 0, 0], sizes = [1, 8, 1], strides = [1, 1, 1]} : vector<3x8x1xf32> to vector<1x8x1xf32>
    %68 = vector.shape_cast %67 : vector<1x8x1xf32> to vector<8x1xf32>
    %69 = arith.mulf %66, %68 : vector<8x1xf32>
    %70 = vector.broadcast %69 : vector<8x1xf32> to vector<8x256xf32>
    %71 = arith.mulf %58, %70 : vector<8x256xf32>
    %72 = vector.extract_strided_slice %5 {offsets = [1, 0, 0], sizes = [1, 8, 1], strides = [1, 1, 1]} : vector<3x8x1xf32> to vector<1x8x1xf32>
    %73 = vector.shape_cast %72 : vector<1x8x1xf32> to vector<8x1xf32>
    %74 = vector.broadcast %73 : vector<8x1xf32> to vector<8x256xf32>
    %75 = arith.addf %71, %74 : vector<8x256xf32>
    %cst_34 = arith.constant 0.000000e+00 : f32
    %76 = vector.broadcast %cst_34 : f32 to vector<8x256xf32>
    %77 = arith.maximumf %75, %76 : vector<8x256xf32>
    %c17_i32_35 = arith.constant 17 : i32
    %78 = tpu.dynamic_rotate %77 by %c17_i32_35 dim 1 : vector<8x256xf32>, i32 -> vector<8x256xf32>
    %c16_i32_36 = arith.constant 16 : i32
    %79 = tpu.dynamic_rotate %77 by %c16_i32_36 dim 1 : vector<8x256xf32>, i32 -> vector<8x256xf32>
    %c15_i32_37 = arith.constant 15 : i32
    %80 = tpu.dynamic_rotate %77 by %c15_i32_37 dim 1 : vector<8x256xf32>, i32 -> vector<8x256xf32>
    %c1_i32_38 = arith.constant 1 : i32
    %81 = tpu.dynamic_rotate %77 by %c1_i32_38 dim 1 : vector<8x256xf32>, i32 -> vector<8x256xf32>
    %c255_i32_39 = arith.constant 255 : i32
    %82 = tpu.dynamic_rotate %77 by %c255_i32_39 dim 1 : vector<8x256xf32>, i32 -> vector<8x256xf32>
    %c241_i32_40 = arith.constant 241 : i32
    %83 = tpu.dynamic_rotate %77 by %c241_i32_40 dim 1 : vector<8x256xf32>, i32 -> vector<8x256xf32>
    %c240_i32_41 = arith.constant 240 : i32
    %84 = tpu.dynamic_rotate %77 by %c240_i32_41 dim 1 : vector<8x256xf32>, i32 -> vector<8x256xf32>
    %c239_i32_42 = arith.constant 239 : i32
    %85 = tpu.dynamic_rotate %77 by %c239_i32_42 dim 1 : vector<8x256xf32>, i32 -> vector<8x256xf32>
    %86 = tpu.concatenate %78, %79, %80, %81, %77, %82, %83, %84, %85 in 0 : vector<8x256xf32>, vector<8x256xf32>, vector<8x256xf32>, vector<8x256xf32>, vector<8x256xf32>, vector<8x256xf32>, vector<8x256xf32>, vector<8x256xf32>, vector<8x256xf32> -> vector<72x256xf32>
    %87 = arith.mulf %86, %3 : vector<72x256xf32>
    %cst_43 = arith.constant dense<0.000000e+00> : vector<8x256xf32>
    %88 = tpu.matmul %9, %87, %cst_43 {dimension_numbers = #tpu.dot_dimension_numbers<[1], [0], [0], [1], [0, 0, 1, 1], [], []>} : vector<8x72xf32>, vector<72x256xf32>, vector<8x256xf32> -> vector<8x256xf32>
    %89 = vector.broadcast %0 : f32 to vector<8x256xf32>
    %90 = arith.mulf %89, %10 : vector<8x256xf32>
    %91 = arith.addf %88, %90 : vector<8x256xf32>
    %92 = vector.broadcast %11 : vector<8x1xf32> to vector<8x256xf32>
    %93 = arith.addf %91, %92 : vector<8x256xf32>
    %cst_44 = arith.constant dense<0.000000e+00> : vector<8xf32>
    %94 = vector.multi_reduction <add>, %93, %cst_44 [1] : vector<8x256xf32> to vector<8xf32>
    %95 = vector.shape_cast %94 : vector<8xf32> to vector<8x1xf32>
    %cst_45 = arith.constant 3.906250e-03 : f32
    %96 = vector.broadcast %cst_45 : f32 to vector<8x1xf32>
    %97 = arith.mulf %95, %96 : vector<8x1xf32>
    %98 = vector.broadcast %97 : vector<8x1xf32> to vector<8x256xf32>
    %99 = arith.subf %93, %98 : vector<8x256xf32>
    %100 = arith.mulf %99, %99 : vector<8x256xf32>
    %cst_46 = arith.constant dense<0.000000e+00> : vector<8xf32>
    %101 = vector.multi_reduction <add>, %100, %cst_46 [1] : vector<8x256xf32> to vector<8xf32>
    %102 = vector.shape_cast %101 : vector<8xf32> to vector<8x1xf32>
    %cst_47 = arith.constant 3.906250e-03 : f32
    %103 = vector.broadcast %cst_47 : f32 to vector<8x1xf32>
    %104 = arith.mulf %102, %103 : vector<8x1xf32>
    %cst_48 = arith.constant 9.99999974E-6 : f32
    %105 = vector.broadcast %cst_48 : f32 to vector<8x1xf32>
    %106 = arith.addf %104, %105 : vector<8x1xf32>
    %107 = math.rsqrt %106 : vector<8x1xf32>
    %108 = vector.extract_strided_slice %4 {offsets = [2, 0, 0], sizes = [1, 8, 1], strides = [1, 1, 1]} : vector<3x8x1xf32> to vector<1x8x1xf32>
    %109 = vector.shape_cast %108 : vector<1x8x1xf32> to vector<8x1xf32>
    %110 = arith.mulf %107, %109 : vector<8x1xf32>
    %111 = vector.broadcast %110 : vector<8x1xf32> to vector<8x256xf32>
    %112 = arith.mulf %99, %111 : vector<8x256xf32>
    %113 = vector.extract_strided_slice %5 {offsets = [2, 0, 0], sizes = [1, 8, 1], strides = [1, 1, 1]} : vector<3x8x1xf32> to vector<1x8x1xf32>
    %114 = vector.shape_cast %113 : vector<1x8x1xf32> to vector<8x1xf32>
    %115 = vector.broadcast %114 : vector<8x1xf32> to vector<8x256xf32>
    %116 = arith.addf %112, %115 : vector<8x256xf32>
    %c0_49 = arith.constant 0 : index
    %c0_50 = arith.constant 0 : index
    %c0_51 = arith.constant 0 : index
    %117 = vector.load %arg12[%c0_49, %c0_50, %c0_51] : memref<1x8x256xf32, #tpu.memory_space<vmem>>, vector<1x8x256xf32>
    %118 = vector.shape_cast %117 : vector<1x8x256xf32> to vector<8x256xf32>
    %119 = vector.shape_cast %116 : vector<8x256xf32> to vector<1x8x256xf32>
    tpu.vector_store %arg12[%c0_49, %c0_50, %c0_51], %119 {strides = array<i32>} : memref<1x8x256xf32, #tpu.memory_space<vmem>>, vector<1x8x256xf32>,
    return
  }
  func.func @transform_0(%arg0: i32, %arg1: memref<1xf32, #tpu.memory_space<smem>>) -> (i32, i32, i32) {
    %c0_i32 = arith.constant 0 : i32
    %c0_i32_0 = arith.constant 0 : i32
    %c0_i32_1 = arith.constant 0 : i32
    return %arg0, %c0_i32, %c0_i32_0 : i32, i32, i32
  }
  func.func @transform_1(%arg0: i32, %arg1: memref<1xf32, #tpu.memory_space<smem>>) -> (i32, i32) {
    %c0_i32 = arith.constant 0 : i32
    %c0_i32_0 = arith.constant 0 : i32
    %c0_i32_1 = arith.constant 0 : i32
    return %c0_i32, %c0_i32_0 : i32, i32
  }
  func.func @transform_2(%arg0: i32, %arg1: memref<1xf32, #tpu.memory_space<smem>>) -> (i32, i32, i32) {
    %c0_i32 = arith.constant 0 : i32
    %c0_i32_0 = arith.constant 0 : i32
    %c0_i32_1 = arith.constant 0 : i32
    %c0_i32_2 = arith.constant 0 : i32
    return %c0_i32, %c0_i32_0, %c0_i32_1 : i32, i32, i32
  }
  func.func @transform_3(%arg0: i32, %arg1: memref<1xf32, #tpu.memory_space<smem>>) -> (i32, i32, i32) {
    %c0_i32 = arith.constant 0 : i32
    %c0_i32_0 = arith.constant 0 : i32
    %c0_i32_1 = arith.constant 0 : i32
    %c0_i32_2 = arith.constant 0 : i32
    return %c0_i32, %c0_i32_0, %c0_i32_1 : i32, i32, i32
  }
  func.func @transform_4(%arg0: i32, %arg1: memref<1xf32, #tpu.memory_space<smem>>) -> (i32, i32) {
    %c0_i32 = arith.constant 0 : i32
    %c0_i32_0 = arith.constant 0 : i32
    %c0_i32_1 = arith.constant 0 : i32
    return %c0_i32, %c0_i32_0 : i32, i32
  }
  func.func @transform_5(%arg0: i32, %arg1: memref<1xf32, #tpu.memory_space<smem>>) -> (i32, i32) {
    %c0_i32 = arith.constant 0 : i32
    %c0_i32_0 = arith.constant 0 : i32
    %c0_i32_1 = arith.constant 0 : i32
    return %c0_i32, %c0_i32_0 : i32, i32
  }
  func.func @transform_6(%arg0: i32, %arg1: memref<1xf32, #tpu.memory_space<smem>>) -> (i32, i32) {
    %c0_i32 = arith.constant 0 : i32
    %c0_i32_0 = arith.constant 0 : i32
    %c0_i32_1 = arith.constant 0 : i32
    return %c0_i32, %c0_i32_0 : i32, i32
  }
  func.func @transform_7(%arg0: i32, %arg1: memref<1xf32, #tpu.memory_space<smem>>) -> (i32, i32) {
    %c0_i32 = arith.constant 0 : i32
    %c0_i32_0 = arith.constant 0 : i32
    %c0_i32_1 = arith.constant 0 : i32
    return %c0_i32, %c0_i32_0 : i32, i32
  }
  func.func @transform_8(%arg0: i32, %arg1: memref<1xf32, #tpu.memory_space<smem>>) -> (i32, i32) {
    %c0_i32 = arith.constant 0 : i32
    %c0_i32_0 = arith.constant 0 : i32
    %c0_i32_1 = arith.constant 0 : i32
    return %c0_i32, %c0_i32_0 : i32, i32
  }
  func.func @transform_9(%arg0: i32, %arg1: memref<1xf32, #tpu.memory_space<smem>>) -> (i32, i32) {
    %c0_i32 = arith.constant 0 : i32
    %c0_i32_0 = arith.constant 0 : i32
    %c0_i32_1 = arith.constant 0 : i32
    return %c0_i32, %c0_i32_0 : i32, i32
  }
  func.func @transform_10(%arg0: i32, %arg1: memref<1xf32, #tpu.memory_space<smem>>) -> (i32, i32, i32) {
    %c0_i32 = arith.constant 0 : i32
    %c0_i32_0 = arith.constant 0 : i32
    %c0_i32_1 = arith.constant 0 : i32
    return %arg0, %c0_i32, %c0_i32_0 : i32, i32, i32
  }
}

</mosaic_0001>

<llo_original>
// kernel: tpu_custom_call.1
$region0: #{tpu_custom_call.1}
  #allocation0 [shape = 'u32[]', space=smem, size = 0x4, offset = 0x4, fixed_abs, tag = 'smem constant byte address 0x4 - core index']
  #allocation1 [shape = 'u32[144,128]{1,0:T(1,128)}', space=vmem, size = 0x12000, scoped, tag = 'internal scratch']
  %s0 = inlined_call_operand.hbm [shape: f32[8,128], index: 0, kind: input, shape index: {}]
  %s1 = inlined_call_operand.hbm [shape: f32[8,128], index: 1, kind: output, shape index: {}]
  %s2 = sld [smem:[#allocation0]]
  $region18: #{tpu_custom_call.1} parent=0
    _
  %s4 = ssub.s32 1, %s2
  %s5 = scalar_select 0, %s4, %s2
  $region1: #{tpu_custom_call.1} parent=0
    #allocation2 [shape = 'u8[4096]{0}', space=vmem, size = 0x1000, scoped, tag = 'input window, operand 0, single buffered']
    #allocation3 [shape = 's32[1]{0}', space=sflag, size = 0x4, scoped, tag = 'scoped memory for tpu_custom_call.1']
    #allocation4 [shape = 's32[1]{0}', space=sflag, size = 0x4, scoped, tag = 'scoped memory for tpu_custom_call.1']
    #allocation5 [shape = 'u8[4096]{0}', space=vmem, size = 0x1000, scoped, tag = 'output window, operand 0, single buffered']
    %6 = vsyncpa [#allocation3], 0
    %7 = vsyncpa [#allocation4], 0
    // Predicated region
    $region2: #{tpu_custom_call.1} parent=1 // pred_check
      _
    $region3: #{tpu_custom_call.1} parent=1 // pred_check_branch
      %9 = sbr.rel (0) target = $region5
    $region4: #{tpu_custom_call.1} parent=1 // pred_region
      %s11 = ssub.s32 128, 128
      %12 = vsyncadd [#allocation3], %s11
      %s14 = sshll.u32 [#allocation2], 4
      %s15 = int_to_ptr.vmem [resolvable:$true] %s14
      %17 = dma.hbm_to_vmem [thread:$0]  %s0, 128, %s15, [#allocation3]
    $region5: #{tpu_custom_call.1} parent=1 // pred_fallthru
      _
    // Predicated region
    $region6: #{tpu_custom_call.1} parent=1 // pred_check
      _
    $region7: #{tpu_custom_call.1} parent=1 // pred_check_branch
      %19 = sbr.rel (0) target = $region9
    $region8: #{tpu_custom_call.1} parent=1 // pred_region
      %20 = dma.done [#allocation3], 128
    $region9: #{tpu_custom_call.1} parent=1 // pred_fallthru
      _
    %v21 = vld [vmem:[#allocation2] sm:$0xff]
    %22 = vrot.lane.b32.xlu0 %v21, 1
    %v23 = vpop.permute.xlu0 %22
    %24 = vst [vmem:[#allocation5] sm:$0xff] %v23
    // Predicated region
    $region10: #{tpu_custom_call.1} parent=1 // pred_check
      _
    $region11: #{tpu_custom_call.1} parent=1 // pred_check_branch
      %26 = sbr.rel (0) target = $region13
    $region12: #{tpu_custom_call.1} parent=1 // pred_region
      %s28 = ssub.s32 128, 128
      %29 = vsyncadd [#allocation4], %s28
      %s31 = sshll.u32 [#allocation5], 4
      %s32 = int_to_ptr.vmem [resolvable:$true] %s31
      %34 = dma.vmem_to_hbm [thread:$0]  %s32, 128, %s1, [#allocation4]
    $region13: #{tpu_custom_call.1} parent=1 // pred_fallthru
      _
    // Predicated region
    $region14: #{tpu_custom_call.1} parent=1 // pred_check
      _
    $region15: #{tpu_custom_call.1} parent=1 // pred_check_branch
      %36 = sbr.rel (0) target = $region17
    $region16: #{tpu_custom_call.1} parent=1 // pred_region
      %37 = dma.done [#allocation4], 128
    $region17: #{tpu_custom_call.1} parent=1 // pred_fallthru
      _
    %38 = vsyncpa [#allocation3], 1
    %39 = vsyncpa [#allocation4], 1

// kernel: tile.44
$region0: #{tile.44}
  %s0 = inlined_call_operand.vmem [shape: f32[2,4,256], index: 0, kind: input, shape index: {}]
  %s1 = inlined_call_operand.vmem [shape: f32[8,256], index: 1, kind: output, shape index: {}]
  $region1: #{tile.44} parent=0
    #allocation0 [shape = 'u8[16384]{0}', space=vmem, size = 0x4000, scoped, tag = 'scoped mem for input reshape']
    %s3 = sshllo.u32 0, 4
    %s4 = smul.addr 4, 3
    %s5 = scalar_lea.vmem %s0, %s4
    %v6 = vld [vmem:[%s5] sm:%s3]
    %s7 = scalar_lea.vmem [#allocation0], 24
    %8 = vst [vmem:[%s7] sm:%s3] %v6
    %s9 = smul.addr 4, 2
    %s10 = scalar_lea.vmem %s0, %s9
    %v11 = vld [vmem:[%s10] sm:%s3]
    %s12 = scalar_lea.vmem [#allocation0], 16
    %13 = vst [vmem:[%s12] sm:%s3] %v11
    %s14 = scalar_lea.vmem %s0, 4
    %v15 = vld [vmem:[%s14] sm:%s3]
    %s16 = scalar_lea.vmem [#allocation0], 8
    %17 = vst [vmem:[%s16] sm:%s3] %v15
    %v18 = vld [vmem:[%s0] sm:%s3]
    %19 = vst [vmem:[#allocation0] sm:%s3] %v18
    %v20 = vld [vmem:[#allocation0] sm:$0xf]
    %21 = vst [vmem:[%s1] sm:$0xf] %v20
    %s22 = scalar_lea.vmem [#allocation0], 8
    %v23 = vld [vmem:[%s22] sm:$0xf]
    %s24 = scalar_lea.vmem %s1, 8
    %25 = vst [vmem:[%s24] sm:$0xf] %v23
    %s26 = scalar_lea.vmem [#allocation0], 16
    %v27 = vld [vmem:[%s26] sm:$0xf]
    %s28 = scalar_lea.vmem %s1, 4
    %29 = vst [vmem:[%s28] sm:$0xf] %v27
    %s30 = scalar_lea.vmem [#allocation0], 24
    %v31 = vld [vmem:[%s30] sm:$0xf]
    %s32 = scalar_lea.vmem %s1, 12
    %33 = vst [vmem:[%s32] sm:$0xf] %v31

// kernel: tile.48
$region0: #{tile.48}
  #allocation0 [shape = 's32[1]{0}', space=sflag, size = 0x4, scoped, tag = 'scoped memory for tile.48']
  %s0 = inlined_call_operand.vmem [shape: f32[4], index: 0, kind: input, shape index: {}]
  %s1 = inlined_call_operand.vmem [shape: f32[2,4], index: 1, kind: output, shape index: {}]
  // Predicated region
  $region2: #{tile.48} parent=0 // pred_check
    _
  $region3: #{tile.48} parent=0 // pred_check_branch
    %3 = sbr.rel (0) target = $region5
  $region4: #{tile.48} parent=0 // pred_region
    _
  $region5: #{tile.48} parent=0 // pred_fallthru
    _
  %v4 = vld [vmem:[%s0] ss:$0 sm:$0xff]
  %5 = vst [vmem:[%s1] sm:$0x3] %v4

// kernel: tile.0
$region0: #{tile.0}
  %s0 = inlined_call_operand.vmem [shape: f32[2,4], index: 0, kind: input, shape index: {}]
  %s1 = inlined_call_operand.vmem [shape: f32[8,1], index: 1, kind: output, shape index: {}]
  $region1: #{tile.0} parent=0
    #allocation0 [shape = 'u8[4096]{0}', space=vmem, size = 0x1000, scoped, tag = 'scoped mem for input reshape']
    %s3 = sshllo.u32 0, 2
    %v4 = vld [vmem:[%s0] sm:%s3]
    %5 = vst [vmem:[#allocation0] sm:%s3] %v4
    %v6 = vld [vmem:[#allocation0] sm:$0x3]
    %vm7 = vcmask 7168
    %8 = vst.msk [vmem:[%s1] ss:$4 sm:$0x3] %vm7, %v6
    %v9 = vld [vmem:[#allocation0] sm:$0x3]
    %10 = vrot.lane.b32.xlu0 %v9, 127
    %v11 = vpop.permute.xlu0 %10
    %vm12 = vcmask 7168
    %s13 = scalar_lea.vmem %s1, 1
    %14 = vst.msk [vmem:[%s13] ss:$4 sm:$0x3] %vm12, %v11
    %v15 = vld [vmem:[#allocation0] sm:$0x3]
    %16 = vrot.lane.b32.xlu0 %v15, 126
    %v17 = vpop.permute.xlu0 %16
    %vm18 = vcmask 7168
    %s19 = scalar_lea.vmem %s1, 2
    %20 = vst.msk [vmem:[%s19] ss:$4 sm:$0x3] %vm18, %v17
    %v21 = vld [vmem:[#allocation0] sm:$0x3]
    %22 = vrot.lane.b32.xlu0 %v21, 125
    %v23 = vpop.permute.xlu0 %22
    %vm24 = vcmask 7168
    %s25 = scalar_lea.vmem %s1, 3
    %26 = vst.msk [vmem:[%s25] ss:$4 sm:$0x3] %vm24, %v23

// kernel: odefunc_forward.1
$region0: #{odefunc_forward.1}
  #allocation0 [shape = 'u32[]', space=smem, size = 0x4, offset = 0x4, fixed_abs, tag = 'smem constant byte address 0x4 - core index']
  #allocation1 [shape = 'u32[144,128]{1,0:T(1,128)}', space=vmem, size = 0x12000, scoped, tag = 'internal scratch']
  #allocation2 [shape = 's32[1]{0}', space=sflag, size = 0x4, scoped, tag = 'scoped memory for odefunc_forward.1']
  #allocation3 [shape = 'f32[1]{0:T(128)S(6)}', space=smem, size = 0x200, scoped, tag = 'prefetched SMEM operand 0']
  %s0 = inlined_call_operand.<no memory space> [shape: f32[1], index: 0, kind: input, shape index: {}]
  %s1 = inlined_call_operand.vmem [shape: f32[1,8,256], index: 1, kind: input, shape index: {}]
  %s2 = inlined_call_operand.vmem [shape: f32[72,256], index: 2, kind: input, shape index: {}]
  %s3 = inlined_call_operand.vmem [shape: f32[3,8,1], index: 3, kind: input, shape index: {}]
  %s4 = inlined_call_operand.vmem [shape: f32[3,8,1], index: 4, kind: input, shape index: {}]
  %s5 = inlined_call_operand.vmem [shape: f32[8,72], index: 5, kind: input, shape index: {}]
  %s6 = inlined_call_operand.vmem [shape: f32[8,256], index: 6, kind: input, shape index: {}]
  %s7 = inlined_call_operand.vmem [shape: f32[8,1], index: 7, kind: input, shape index: {}]
  %s8 = inlined_call_operand.vmem [shape: f32[8,72], index: 8, kind: input, shape index: {}]
  %s9 = inlined_call_operand.vmem [shape: f32[8,256], index: 9, kind: input, shape index: {}]
  %s10 = inlined_call_operand.vmem [shape: f32[8,1], index: 10, kind: input, shape index: {}]
  %s11 = inlined_call_operand.vmem [shape: f32[1,8,256], index: 11, kind: output, shape index: {}]
  %s12 = sld [smem:[#allocation0]]
  $region50: #{odefunc_forward.1} parent=0
    _
  %s14 = ssub.s32 1, %s12
  %s15 = scalar_select 0, %s14, %s12
  %16 = sst [smem:[#allocation3]] %s0
  // Predicated region
  $region2: #{odefunc_forward.1} parent=0 // pred_check
    _
  $region3: #{odefunc_forward.1} parent=0 // pred_check_branch
    %18 = sbr.rel (0) target = $region5
  $region4: #{odefunc_forward.1} parent=0 // pred_region
    _
  $region5: #{odefunc_forward.1} parent=0 // pred_fallthru
    _
  // Predicated region
  $region6: #{odefunc_forward.1} parent=0 // pred_check
    _
  $region7: #{odefunc_forward.1} parent=0 // pred_check_branch
    %20 = sbr.rel (0) target = $region9
  $region8: #{odefunc_forward.1} parent=0 // pred_region
    _
  $region9: #{odefunc_forward.1} parent=0 // pred_fallthru
    _
  // Predicated region
  $region10: #{odefunc_forward.1} parent=0 // pred_check
    _
  $region11: #{odefunc_forward.1} parent=0 // pred_check_branch
    %22 = sbr.rel (0) target = $region13
  $region12: #{odefunc_forward.1} parent=0 // pred_region
    _
  $region13: #{odefunc_forward.1} parent=0 // pred_fallthru
    _
  // Predicated region
  $region14: #{odefunc_forward.1} parent=0 // pred_check
    _
  $region15: #{odefunc_forward.1} parent=0 // pred_check_branch
    %24 = sbr.rel (0) target = $region17
  $region16: #{odefunc_forward.1} parent=0 // pred_region
    _
  $region17: #{odefunc_forward.1} parent=0 // pred_fallthru
    _
  // Predicated region
  $region18: #{odefunc_forward.1} parent=0 // pred_check
    _
  $region19: #{odefunc_forward.1} parent=0 // pred_check_branch
    %26 = sbr.rel (0) target = $region21
  $region20: #{odefunc_forward.1} parent=0 // pred_region
    _
  $region21: #{odefunc_forward.1} parent=0 // pred_fallthru
    _
  // Predicated region
  $region22: #{odefunc_forward.1} parent=0 // pred_check
    _
  $region23: #{odefunc_forward.1} parent=0 // pred_check_branch
    %28 = sbr.rel (0) target = $region25
  $region24: #{odefunc_forward.1} parent=0 // pred_region
    _
  $region25: #{odefunc_forward.1} parent=0 // pred_fallthru
    _
  // Predicated region
  $region26: #{odefunc_forward.1} parent=0 // pred_check
    _
  $region27: #{odefunc_forward.1} parent=0 // pred_check_branch
    %30 = sbr.rel (0) target = $region29
  $region28: #{odefunc_forward.1} parent=0 // pred_region
    _
  $region29: #{odefunc_forward.1} parent=0 // pred_fallthru
    _
  // Predicated region
  $region30: #{odefunc_forward.1} parent=0 // pred_check
    _
  $region31: #{odefunc_forward.1} parent=0 // pred_check_branch
    %32 = sbr.rel (0) target = $region33
  $region32: #{odefunc_forward.1} parent=0 // pred_region
    _
  $region33: #{odefunc_forward.1} parent=0 // pred_fallthru
    _
  // Predicated region
  $region34: #{odefunc_forward.1} parent=0 // pred_check
    _
  $region35: #{odefunc_forward.1} parent=0 // pred_check_branch
    %34 = sbr.rel (0) target = $region37
  $region36: #{odefunc_forward.1} parent=0 // pred_region
    _
  $region37: #{odefunc_forward.1} parent=0 // pred_fallthru
    _
  // Predicated region
  $region38: #{odefunc_forward.1} parent=0 // pred_check
    _
  $region39: #{odefunc_forward.1} parent=0 // pred_check_branch
    %36 = sbr.rel (0) target = $region41
  $region40: #{odefunc_forward.1} parent=0 // pred_region
    _
  $region41: #{odefunc_forward.1} parent=0 // pred_fallthru
    _
  %s37 = sld [smem:[#allocation3]]
  %v38 = vld [vmem:[%s1] sm:$0xff]
  %v39 = vld [vmem:[%s1 + $0x8] sm:$0xff]
  %v40 = vld [vmem:[%s2] sm:$0xff]
  %v41 = vld [vmem:[%s2 + $0x8] sm:$0xff]
  %v42 = vld [vmem:[%s2 + $0x10] sm:$0xff]
  %v43 = vld [vmem:[%s2 + $0x18] sm:$0xff]
  %v44 = vld [vmem:[%s2 + $0x20] sm:$0xff]
  %v45 = vld [vmem:[%s2 + $0x28] sm:$0xff]
  %v46 = vld [vmem:[%s2 + $0x30] sm:$0xff]
  %v47 = vld [vmem:[%s2 + $0x38] sm:$0xff]
  %v48 = vld [vmem:[%s2 + $0x40] sm:$0xff]
  %v49 = vld [vmem:[%s2 + $0x48] sm:$0xff]
  %v50 = vld [vmem:[%s2 + $0x50] sm:$0xff]
  %v51 = vld [vmem:[%s2 + $0x58] sm:$0xff]
  %v52 = vld [vmem:[%s2 + $0x60] sm:$0xff]
  %v53 = vld [vmem:[%s2 + $0x68] sm:$0xff]
  %v54 = vld [vmem:[%s2 + $0x70] sm:$0xff]
  %v55 = vld [vmem:[%s2 + $0x78] sm:$0xff]
  %v56 = vld [vmem:[%s2 + $0x80] sm:$0xff]
  %v57 = vld [vmem:[%s2 + $0x88] sm:$0xff]
  %v58 = vld [vmem:[%s3] sm:$0xff]
  %v59 = vld [vmem:[%s3 + $0x8] sm:$0xff]
  %v60 = vld [vmem:[%s3 + $0x10] sm:$0xff]
  %v61 = vld [vmem:[%s4] sm:$0xff]
  %v62 = vld [vmem:[%s4 + $0x8] sm:$0xff]
  %v63 = vld [vmem:[%s4 + $0x10] sm:$0xff]
  %v64 = vld [vmem:[%s5] sm:$0xff]
  %v65 = vld [vmem:[%s6] sm:$0xff]
  %v66 = vld [vmem:[%s6 + $0x8] sm:$0xff]
  %v67 = vld [vmem:[%s7] sm:$0xff]
  %v68 = vld [vmem:[%s8] sm:$0xff]
  %v69 = vld [vmem:[%s9] sm:$0xff]
  %v70 = vld [vmem:[%s9 + $0x8] sm:$0xff]
  %v71 = vld [vmem:[%s10] sm:$0xff]
  %v72 = vadd.f32 %v38, %v39
  %73 = vadd.xlane.f32.xlu0 %v72
  %v74 = vpop.xlane.xlu0 %73
  %v75 = vmul.f32 %v74, 0.00390625
  %v76 = vsub.f32 %v38, %v75
  %v77 = vsub.f32 %v39, %v75
  %v78 = vmul.f32 %v76, %v76
  %v79 = vmul.f32 %v77, %v77
  %v80 = vadd.f32 %v78, %v79
  %81 = vadd.xlane.f32.xlu0 %v80
  %v82 = vpop.xlane.xlu0 %81
  %v83 = vmul.f32 %v82, 0.00390625
  %v84 = vadd.f32 %v83, 1e-05
  %v85 = vrsqrt.pop %v84
  %v86 = vmul.f32 %v85, %v58
  %88 = vset.pattern.permute.xlu0 0
  %89 = vperm.xlu0 %88, %v86
  %v90 = vpop.permute.xlu0 %89
  %v92 = vmul.f32 %v76, %v90
  %v93 = vmul.f32 %v77, %v90
  %95 = vset.pattern.permute.xlu0 0
  %96 = vperm.xlu0 %95, %v61
  %v97 = vpop.permute.xlu0 %96
  %v99 = vadd.f32 %v92, %v97
  %v100 = vadd.f32 %v93, %v97
  %v101 = vmax.f32 %v99, 0.0
  %v102 = vmax.f32 %v100, 0.0
  %103 = vrot.lane.b32.xlu0 %v101, 17
  %v104 = vpop.permute.xlu0 %103
  %105 = vrot.lane.b32.xlu0 %v102, 17
  %v106 = vpop.permute.xlu0 %105
  %v107 = vlaneseq
  %v108 = vand.u32 %v107, 127
  %vm109 = vcmp.lt.s32.totalorder %v108, 17
  %v110 = vsel %vm109, %v104, %v106
  %v111 = vsel %vm109, %v106, %v104
  %112 = vrot.lane.b32.xlu0 %v101, 16
  %v113 = vpop.permute.xlu0 %112
  %114 = vrot.lane.b32.xlu0 %v102, 16
  %v115 = vpop.permute.xlu0 %114
  %vm116 = vcmp.lt.s32.totalorder %v108, 16
  %v117 = vsel %vm116, %v113, %v115
  %v118 = vsel %vm116, %v115, %v113
  %119 = vrot.lane.b32.xlu0 %v101, 15
  %v120 = vpop.permute.xlu0 %119
  %121 = vrot.lane.b32.xlu0 %v102, 15
  %v122 = vpop.permute.xlu0 %121
  %vm123 = vcmp.lt.s32.totalorder %v108, 15
  %v124 = vsel %vm123, %v120, %v122
  %v125 = vsel %vm123, %v122, %v120
  %126 = vrot.lane.b32.xlu0 %v101, 1
  %v127 = vpop.permute.xlu0 %126
  %128 = vrot.lane.b32.xlu0 %v102, 1
  %v129 = vpop.permute.xlu0 %128
  %vm130 = vcmp.lt.s32.totalorder %v108, 1
  %v131 = vsel %vm130, %v127, %v129
  %v132 = vsel %vm130, %v129, %v127
  %133 = vrot.lane.b32.xlu0 %v101, 127
  %v134 = vpop.permute.xlu0 %133
  %135 = vrot.lane.b32.xlu0 %v102, 127
  %v136 = vpop.permute.xlu0 %135
  %vm137 = vcmp.lt.s32.totalorder %v108, 127
  %v138 = vsel %vm137, %v134, %v136
  %v139 = vsel %vm137, %v136, %v134
  %140 = vrot.lane.b32.xlu0 %v101, 113
  %v141 = vpop.permute.xlu0 %140
  %142 = vrot.lane.b32.xlu0 %v102, 113
  %v143 = vpop.permute.xlu0 %142
  %vm144 = vcmp.lt.s32.totalorder %v108, 113
  %v145 = vsel %vm144, %v141, %v143
  %v146 = vsel %vm144, %v143, %v141
  %147 = vrot.lane.b32.xlu0 %v101, 112
  %v148 = vpop.permute.xlu0 %147
  %149 = vrot.lane.b32.xlu0 %v102, 112
  %v150 = vpop.permute.xlu0 %149
  %vm151 = vcmp.lt.s32.totalorder %v108, 112
  %v152 = vsel %vm151, %v148, %v150
  %v153 = vsel %vm151, %v150, %v148
  %154 = vrot.lane.b32.xlu0 %v101, 111
  %v155 = vpop.permute.xlu0 %154
  %156 = vrot.lane.b32.xlu0 %v102, 111
  %v157 = vpop.permute.xlu0 %156
  %vm158 = vcmp.lt.s32.totalorder %v108, 111
  %v159 = vsel %vm158, %v155, %v157
  %v160 = vsel %vm158, %v157, %v155
  %v161 = vmul.f32 %v111, %v40
  %v162 = vmul.f32 %v110, %v41
  %v163 = vmul.f32 %v118, %v42
  %v164 = vmul.f32 %v117, %v43
  %v165 = vmul.f32 %v125, %v44
  %v166 = vmul.f32 %v124, %v45
  %v167 = vmul.f32 %v132, %v46
  %v168 = vmul.f32 %v131, %v47
  %v169 = vmul.f32 %v101, %v48
  %v170 = vmul.f32 %v102, %v49
  %v171 = vmul.f32 %v138, %v50
  %v172 = vmul.f32 %v139, %v51
  %v173 = vmul.f32 %v145, %v52
  %v174 = vmul.f32 %v146, %v53
  %v175 = vmul.f32 %v152, %v54
  %v176 = vmul.f32 %v153, %v55
  %v177 = vmul.f32 %v159, %v56
  %v178 = vmul.f32 %v160, %v57
  %v179 = vstv %s37
  %v180 = vmul.f32 %v179, %v65
  %v181 = vmul.f32 %v179, %v66
  %vm182 = vcmask 588800
  %v184 = vsel %vm182, %v64, 0
  %186 = vmatprep.subr.mxu0 %v162
  %187 = vmatpush1.msra.mxu0 %v161
  %188 = vmatprep.subr.mxu0 %v164
  %189 = vmatpush1.msra.mxu0 %v163
  %190 = vmatprep.subr.mxu0 %v166
  %191 = vmatpush1.msra.mxu0 %v165
  %192 = vmatprep.subr.mxu0 %v168
  %193 = vmatpush1.msra.mxu0 %v167
  %194 = vmatprep.subr.mxu0 %v170
  %195 = vmatpush1.msra.mxu0 %v169
  %196 = vmatprep.subr.mxu0 %v172
  %197 = vmatpush1.msra.mxu0 %v171
  %198 = vmatprep.subr.mxu0 %v174
  %199 = vmatpush1.msra.mxu0 %v173
  %200 = vmatprep.subr.mxu0 %v176
  %201 = vmatpush1.msra.mxu0 %v175
  %202 = vmatprep.subr.mxu0 %v178
  %203 = vmatpush1.msra.mxu0 %v177
  %204 = vmatprep.subr.mxu0 0.0
  %205 = vmatpush1.msra.mxu0 0.0
  %206 = vmatprep.subr.mxu0 0.0
  %207 = vmatpush1.msra.mxu0 0.0
  %208 = vmatprep.subr.mxu0 0.0
  %209 = vmatpush1.msra.mxu0 0.0
  %210 = vmatprep.subr.mxu0 0.0
  %211 = vmatpush1.msra.mxu0 0.0
  %212 = vmatprep.subr.mxu0 0.0
  %213 = vmatpush1.msra.mxu0 0.0
  %214 = vmatprep.subr.mxu0 0.0
  %215 = vmatpush1.msra.mxu0 0.0
  %216 = vmatprep.subr.mxu0 0.0
  %217 = vmatpush1.msra.mxu0 0.0
  %218 = vmatprep.subr.mxu0 0.0
  %219 = vmatpush1.msra.mxu0 0.0
  %220 = vmatprep.subr.mxu0 0.0
  %221 = vmatpush1.msra.mxu0 0.0
  %222 = vmatprep.subr.mxu0 0.0
  %223 = vmatpush1.msra.mxu0 0.0
  %224 = vmatprep.subr.mxu0 0.0
  %225 = vmatpush1.msra.mxu0 0.0
  %226 = vmatprep.subr.mxu0 0.0
  %227 = vmatpush1.msra.mxu0 0.0
  %228 = vmatprep.subr.mxu0 0.0
  %229 = vmatpush1.msra.mxu0 0.0
  %230 = vmatprep.subr.mxu0 0.0
  %231 = vmatpush1.msra.mxu0 0.0
  %232 = vmatprep.subr.mxu0 0.0
  %233 = vmatpush1.msra.mxu0 0.0
  %234 = vmatprep.subr.mxu0 0.0
  %235 = vmatpush1.msra.mxu0 0.0
  %236 = vmatprep.subr.mxu0 0.0
  %237 = vmatpush1.msra.mxu0 0.0
  %238 = vmatprep.subr.mxu0 0.0
  %239 = vmatpush1.msra.mxu0 0.0
  %240 = vmatprep.subr.mxu0 0.0
  %241 = vmatpush1.msra.mxu0 0.0
  %242 = vmatprep.subr.mxu0 0.0
  %243 = vmatpush1.msra.mxu0 0.0
  %244 = vmatprep.subr.mxu0 0.0
  %245 = vmatpush1.msra.mxu0 0.0
  %246 = vmatprep.subr.mxu0 0.0
  %247 = vmatpush1.msra.mxu0 0.0
  %248 = vmatprep.subr.mxu0 0.0
  %249 = vmatpush1.msra.mxu0 0.0
  %250 = vmatprep.mubr.f32.mxu0 0.0
  %251 = vmatmul.mubr.f32.gmra.mrb[0].mxu0 %v184
  %v252 = vpop.f32.mrb[0].mxu0
  %v253 = vadd.f32 %v180, %v252
  %v254 = vpop.f32.mrb[0].mxu0
  %v255 = vadd.f32 %v181, %v254
  %256 = vdwg.mxu0
  %258 = vset.pattern.permute.xlu0 0
  %259 = vperm.xlu0 %258, %v67
  %v260 = vpop.permute.xlu0 %259
  %v262 = vadd.f32 %v253, %v260
  %v263 = vadd.f32 %v255, %v260
  %v264 = vadd.f32 %v262, %v263
  %265 = vadd.xlane.f32.xlu0 %v264
  %v266 = vpop.xlane.xlu0 %265
  %v267 = vmul.f32 %v266, 0.00390625
  %v268 = vsub.f32 %v262, %v267
  %v269 = vsub.f32 %v263, %v267
  %v270 = vmul.f32 %v268, %v268
  %v271 = vmul.f32 %v269, %v269
  %v272 = vadd.f32 %v270, %v271
  %273 = vadd.xlane.f32.xlu0 %v272
  %v274 = vpop.xlane.xlu0 %273
  %v275 = vmul.f32 %v274, 0.00390625
  %v276 = vadd.f32 %v275, 1e-05
  %v277 = vrsqrt.pop %v276
  %v278 = vmul.f32 %v277, %v59
  %280 = vset.pattern.permute.xlu0 0
  %281 = vperm.xlu0 %280, %v278
  %v282 = vpop.permute.xlu0 %281
  %v284 = vmul.f32 %v268, %v282
  %v285 = vmul.f32 %v269, %v282
  %287 = vset.pattern.permute.xlu0 0
  %288 = vperm.xlu0 %287, %v62
  %v289 = vpop.permute.xlu0 %288
  %v291 = vadd.f32 %v284, %v289
  %v292 = vadd.f32 %v285, %v289
  %v293 = vmax.f32 %v291, 0.0
  %v294 = vmax.f32 %v292, 0.0
  %295 = vrot.lane.b32.xlu0 %v293, 17
  %v296 = vpop.permute.xlu0 %295
  %297 = vrot.lane.b32.xlu0 %v294, 17
  %v298 = vpop.permute.xlu0 %297
  %v299 = vsel %vm109, %v296, %v298
  %v300 = vsel %vm109, %v298, %v296
  %301 = vrot.lane.b32.xlu0 %v293, 16
  %v302 = vpop.permute.xlu0 %301
  %303 = vrot.lane.b32.xlu0 %v294, 16
  %v304 = vpop.permute.xlu0 %303
  %v305 = vsel %vm116, %v302, %v304
  %v306 = vsel %vm116, %v304, %v302
  %307 = vrot.lane.b32.xlu0 %v293, 15
  %v308 = vpop.permute.xlu0 %307
  %309 = vrot.lane.b32.xlu0 %v294, 15
  %v310 = vpop.permute.xlu0 %309
  %v311 = vsel %vm123, %v308, %v310
  %v312 = vsel %vm123, %v310, %v308
  %313 = vrot.lane.b32.xlu0 %v293, 1
  %v314 = vpop.permute.xlu0 %313
  %315 = vrot.lane.b32.xlu0 %v294, 1
  %v316 = vpop.permute.xlu0 %315
  %v317 = vsel %vm130, %v314, %v316
  %v318 = vsel %vm130, %v316, %v314
  %319 = vrot.lane.b32.xlu0 %v293, 127
  %v320 = vpop.permute.xlu0 %319
  %321 = vrot.lane.b32.xlu0 %v294, 127
  %v322 = vpop.permute.xlu0 %321
  %v323 = vsel %vm137, %v320, %v322
  %v324 = vsel %vm137, %v322, %v320
  %325 = vrot.lane.b32.xlu0 %v293, 113
  %v326 = vpop.permute.xlu0 %325
  %327 = vrot.lane.b32.xlu0 %v294, 113
  %v328 = vpop.permute.xlu0 %327
  %v329 = vsel %vm144, %v326, %v328
  %v330 = vsel %vm144, %v328, %v326
  %331 = vrot.lane.b32.xlu0 %v293, 112
  %v332 = vpop.permute.xlu0 %331
  %333 = vrot.lane.b32.xlu0 %v294, 112
  %v334 = vpop.permute.xlu0 %333
  %v335 = vsel %vm151, %v332, %v334
  %v336 = vsel %vm151, %v334, %v332
  %337 = vrot.lane.b32.xlu0 %v293, 111
  %v338 = vpop.permute.xlu0 %337
  %339 = vrot.lane.b32.xlu0 %v294, 111
  %v340 = vpop.permute.xlu0 %339
  %v341 = vsel %vm158, %v338, %v340
  %v342 = vsel %vm158, %v340, %v338
  %v343 = vmul.f32 %v300, %v40
  %v344 = vmul.f32 %v299, %v41
  %v345 = vmul.f32 %v306, %v42
  %v346 = vmul.f32 %v305, %v43
  %v347 = vmul.f32 %v312, %v44
  %v348 = vmul.f32 %v311, %v45
  %v349 = vmul.f32 %v318, %v46
  %v350 = vmul.f32 %v317, %v47
  %v351 = vmul.f32 %v293, %v48
  %v352 = vmul.f32 %v294, %v49
  %v353 = vmul.f32 %v323, %v50
  %v354 = vmul.f32 %v324, %v51
  %v355 = vmul.f32 %v329, %v52
  %v356 = vmul.f32 %v330, %v53
  %v357 = vmul.f32 %v335, %v54
  %v358 = vmul.f32 %v336, %v55
  %v359 = vmul.f32 %v341, %v56
  %v360 = vmul.f32 %v342, %v57
  %v361 = vmul.f32 %v179, %v69
  %v362 = vmul.f32 %v179, %v70
  %v364 = vsel %vm182, %v68, 0
  %366 = vmatprep.subr.mxu0 %v344
  %367 = vmatpush1.msra.mxu0 %v343
  %368 = vmatprep.subr.mxu0 %v346
  %369 = vmatpush1.msra.mxu0 %v345
  %370 = vmatprep.subr.mxu0 %v348
  %371 = vmatpush1.msra.mxu0 %v347
  %372 = vmatprep.subr.mxu0 %v350
  %373 = vmatpush1.msra.mxu0 %v349
  %374 = vmatprep.subr.mxu0 %v352
  %375 = vmatpush1.msra.mxu0 %v351
  %376 = vmatprep.subr.mxu0 %v354
  %377 = vmatpush1.msra.mxu0 %v353
  %378 = vmatprep.subr.mxu0 %v356
  %379 = vmatpush1.msra.mxu0 %v355
  %380 = vmatprep.subr.mxu0 %v358
  %381 = vmatpush1.msra.mxu0 %v357
  %382 = vmatprep.subr.mxu0 %v360
  %383 = vmatpush1.msra.mxu0 %v359
  %384 = vmatprep.subr.mxu0 0.0
  %385 = vmatpush1.msra.mxu0 0.0
  %386 = vmatprep.subr.mxu0 0.0
  %387 = vmatpush1.msra.mxu0 0.0
  %388 = vmatprep.subr.mxu0 0.0
  %389 = vmatpush1.msra.mxu0 0.0
  %390 = vmatprep.subr.mxu0 0.0
  %391 = vmatpush1.msra.mxu0 0.0
  %392 = vmatprep.subr.mxu0 0.0
  %393 = vmatpush1.msra.mxu0 0.0
  %394 = vmatprep.subr.mxu0 0.0
  %395 = vmatpush1.msra.mxu0 0.0
  %396 = vmatprep.subr.mxu0 0.0
  %397 = vmatpush1.msra.mxu0 0.0
  %398 = vmatprep.subr.mxu0 0.0
  %399 = vmatpush1.msra.mxu0 0.0
  %400 = vmatprep.subr.mxu0 0.0
  %401 = vmatpush1.msra.mxu0 0.0
  %402 = vmatprep.subr.mxu0 0.0
  %403 = vmatpush1.msra.mxu0 0.0
  %404 = vmatprep.subr.mxu0 0.0
  %405 = vmatpush1.msra.mxu0 0.0
  %406 = vmatprep.subr.mxu0 0.0
  %407 = vmatpush1.msra.mxu0 0.0
  %408 = vmatprep.subr.mxu0 0.0
  %409 = vmatpush1.msra.mxu0 0.0
  %410 = vmatprep.subr.mxu0 0.0
  %411 = vmatpush1.msra.mxu0 0.0
  %412 = vmatprep.subr.mxu0 0.0
  %413 = vmatpush1.msra.mxu0 0.0
  %414 = vmatprep.subr.mxu0 0.0
  %415 = vmatpush1.msra.mxu0 0.0
  %416 = vmatprep.subr.mxu0 0.0
  %417 = vmatpush1.msra.mxu0 0.0
  %418 = vmatprep.subr.mxu0 0.0
  %419 = vmatpush1.msra.mxu0 0.0
  %420 = vmatprep.subr.mxu0 0.0
  %421 = vmatpush1.msra.mxu0 0.0
  %422 = vmatprep.subr.mxu0 0.0
  %423 = vmatpush1.msra.mxu0 0.0
  %424 = vmatprep.subr.mxu0 0.0
  %425 = vmatpush1.msra.mxu0 0.0
  %426 = vmatprep.subr.mxu0 0.0
  %427 = vmatpush1.msra.mxu0 0.0
  %428 = vmatprep.subr.mxu0 0.0
  %429 = vmatpush1.msra.mxu0 0.0
  %430 = vmatprep.mubr.f32.mxu0 0.0
  %431 = vmatmul.mubr.f32.gmra.mrb[0].mxu0 %v364
  %v432 = vpop.f32.mrb[0].mxu0
  %v433 = vadd.f32 %v361, %v432
  %v434 = vpop.f32.mrb[0].mxu0
  %v435 = vadd.f32 %v362, %v434
  %436 = vdwg.mxu0
  %438 = vset.pattern.permute.xlu0 0
  %439 = vperm.xlu0 %438, %v71
  %v440 = vpop.permute.xlu0 %439
  %v442 = vadd.f32 %v433, %v440
  %v443 = vadd.f32 %v435, %v440
  %v444 = vadd.f32 %v442, %v443
  %445 = vadd.xlane.f32.xlu0 %v444
  %v446 = vpop.xlane.xlu0 %445
  %v447 = vmul.f32 %v446, 0.00390625
  %v448 = vsub.f32 %v442, %v447
  %v449 = vsub.f32 %v443, %v447
  %v450 = vmul.f32 %v448, %v448
  %v451 = vmul.f32 %v449, %v449
  %v452 = vadd.f32 %v450, %v451
  %453 = vadd.xlane.f32.xlu0 %v452
  %v454 = vpop.xlane.xlu0 %453
  %v455 = vmul.f32 %v454, 0.00390625
  %v456 = vadd.f32 %v455, 1e-05
  %v457 = vrsqrt.pop %v456
  %v458 = vmul.f32 %v457, %v60
  %460 = vset.pattern.permute.xlu0 0
  %461 = vperm.xlu0 %460, %v458
  %v462 = vpop.permute.xlu0 %461
  %v464 = vmul.f32 %v448, %v462
  %v465 = vmul.f32 %v449, %v462
  %467 = vset.pattern.permute.xlu0 0
  %468 = vperm.xlu0 %467, %v63
  %v469 = vpop.permute.xlu0 %468
  %v471 = vadd.f32 %v464, %v469
  %v472 = vadd.f32 %v465, %v469
  %473 = vst [vmem:[%s11] sm:$0xff] %v471
  %474 = vst [vmem:[%s11 + $0x8] sm:$0xff] %v472
  // Predicated region
  $region42: #{odefunc_forward.1} parent=0 // pred_check
    _
  $region43: #{odefunc_forward.1} parent=0 // pred_check_branch
    %476 = sbr.rel (0) target = $region45
  $region44: #{odefunc_forward.1} parent=0 // pred_region
    _
  $region45: #{odefunc_forward.1} parent=0 // pred_fallthru
    _
  // Predicated region
  $region46: #{odefunc_forward.1} parent=0 // pred_check
    _
  $region47: #{odefunc_forward.1} parent=0 // pred_check_branch
    %478 = sbr.rel (0) target = $region49
  $region48: #{odefunc_forward.1} parent=0 // pred_region
    _
  $region49: #{odefunc_forward.1} parent=0 // pred_fallthru
    _

</llo_original>
